<compile_context>
chip_gen: v7x
topology: tpu7x:2x2x1
jax: 0.10.0
libtpu: 0.0.40
codegen_flags: <defaults>
</compile_context>

<pallas_src>
import math
import jax
import jax.numpy as jnp
from jax.experimental import pallas as pl
from jax.experimental.pallas import tpu as pltpu


def mix_channel_attention_kernel(x_ref, w1_ref, w2_ref,
                                 xc_ref, xd_ref, yc_ref, yd_ref):
    """Fused: fc1 -> ReLU -> fc2 -> sigmoid gate, sigmoid(x) gate, both re-weightings.

    x_ref  : (TB, C)   batch tile of the input
    w1_ref : (C, Cr)   fc1 weight, already transposed for x @ w1
    w2_ref : (Cr, C)   fc2 weight, already transposed for h @ w2
    xc_ref : (TB, C)   x * y_C
    xd_ref : (TB, C)   x * y_D
    yc_ref : (TB, C)   y_C
    yd_ref : (TB, C)   y_D
    """
    x = x_ref[...]

    # Squeeze-excite branch: two small MXU matmuls with f32 accumulation.
    h = jnp.maximum(
        jnp.dot(x, w1_ref[...], preferred_element_type=jnp.float32), 0.0)
    y_c = jax.nn.sigmoid(
        jnp.dot(h, w2_ref[...], preferred_element_type=jnp.float32))

    # Second gate: the reference forward overwrites the fc3/fc4 result with sigmoid(x).
    y_d = jax.nn.sigmoid(x)

    xc_ref[...] = (x * y_c).astype(xc_ref.dtype)
    xd_ref[...] = (x * y_d).astype(xd_ref.dtype)
    yc_ref[...] = y_c.astype(yc_ref.dtype)
    yd_ref[...] = y_d.astype(yd_ref.dtype)


def mix_channel_attention(x, w1, w2, *, block_b=2048):
    """x: (B, C) f32. w1: (C, Cr) = fc1.weight.T. w2: (Cr, C) = fc2.weight.T.

    block_b=2048 keeps the double-buffered VMEM working set (~10 MiB at C=128, f32)
    inside the default scoped limit on v5e/v6e/v7x while amortizing per-step overhead.
    """
    B, C = x.shape
    Cr = w1.shape[1]
    assert w1.shape == (C, Cr) and w2.shape == (Cr, C)

    # Batch-row tiling.  tb is either block_b (a multiple of 8) or the full batch, so
    # the (8, 128) block constraint is always satisfied; ragged trailing blocks are
    # handled by cdiv + Mosaic's masked last-block stores (no giant fallback block).
    tb = min(block_b, B)
    grid = (pl.cdiv(B, tb),)

    row_spec = pl.BlockSpec((tb, C), lambda i: (i, 0))
    w1_spec = pl.BlockSpec((C, Cr), lambda i: (0, 0))
    w2_spec = pl.BlockSpec((Cr, C), lambda i: (0, 0))

    out_shape = tuple(jax.ShapeDtypeStruct((B, C), x.dtype) for _ in range(4))

    itemsize = jnp.dtype(x.dtype).itemsize
    cost = pl.CostEstimate(
        flops=4 * B * C * Cr,                       # two (B,C)x(C,Cr)-class matmuls
        transcendentals=2 * B * C,                  # two sigmoids over (B, C)
        bytes_accessed=(5 * B * C + 2 * C * Cr) * itemsize,
    )

    return pl.pallas_call(
        mix_channel_attention_kernel,
        out_shape=out_shape,
        grid=grid,
        in_specs=[row_spec, w1_spec, w2_spec],
        out_specs=(row_spec, row_spec, row_spec, row_spec),
        compiler_params=pltpu.CompilerParams(
            dimension_semantics=("parallel",)),
        cost_estimate=cost,
    )(x, w1, w2)


if __name__ == "__main__":
    # channel // reduction must be >= 1; channel = 128 keeps the lane axis dense.
    channel, reduction, batch = 128, 16, 8
    c_red = channel // reduction  # 8

    key = jax.random.PRNGKey(0)
    kx, k1, k2 = jax.random.split(key, 3)

    x = jax.random.normal(kx, (batch, channel), jnp.float32)
    # torch nn.Linear-style uniform init; weights stored pre-transposed for x @ W.
    b1 = 1.0 / math.sqrt(channel)
    w1 = jax.random.uniform(k1, (channel, c_red), jnp.float32, -b1, b1)   # fc1.weight.T
    b2 = 1.0 / math.sqrt(c_red)
    w2 = jax.random.uniform(k2, (c_red, channel), jnp.float32, -b2, b2)   # fc2.weight.T
    # TODO(synk): fc3/fc4 weights exist in the torch module but never affect the
    # forward outputs (y_D is overwritten by sigmoid(x)), so they are not created.

    def ref_outputs(xv):
        h_ref = jnp.maximum(xv @ w1, 0.0)
        y_c_ref = jax.nn.sigmoid(h_ref @ w2)
        y_d_ref = jax.nn.sigmoid(xv)
        return xv * y_c_ref, xv * y_d_ref, y_c_ref, y_d_ref

    # 1) Small single-block case.
    outs = jax.block_until_ready(mix_channel_attention(x, w1, w2))
    refs = ref_outputs(x)
    for o, r in zip(outs, refs):
        assert o.shape == (batch, channel) and o.dtype == jnp.float32
        assert jnp.allclose(o, r, atol=1e-5, rtol=1e-5)

    # 2) Ragged multi-block case (exercises the cdiv grid + masked last block).
    x_big = jax.random.normal(jax.random.PRNGKey(1), (24, channel), jnp.float32)
    outs_big = jax.block_until_ready(
        mix_channel_attention(x_big, w1, w2, block_b=16))
    refs_big = ref_outputs(x_big)
    for o, r in zip(outs_big, refs_big):
        assert jnp.allclose(o, r, atol=1e-5, rtol=1e-5)

    print("KERNEL_OK")
</pallas_src>

<mosaic_0001>
module attributes {stable_mosaic.version = 11 : i64} {
  func.func @mix_channel_attention_kernel(%arg0: i32, %arg1: memref<8x128xf32, #tpu.memory_space<vmem>>, %arg2: memref<128x8xf32, #tpu.memory_space<vmem>>, %arg3: memref<8x128xf32, #tpu.memory_space<vmem>>, %arg4: memref<8x128xf32, #tpu.memory_space<vmem>>, %arg5: memref<8x128xf32, #tpu.memory_space<vmem>>, %arg6: memref<8x128xf32, #tpu.memory_space<vmem>>, %arg7: memref<8x128xf32, #tpu.memory_space<vmem>>) attributes {dimension_semantics = [#tpu.dimension_semantics<parallel>], iteration_bounds = array<i64: 1>, scalar_prefetch = 0 : i64, scratch_operands = 0 : i64, tpu.core_type = #tpu.core_type<tc>, window_params = [{transform_indices = @transform_0, window_bounds = array<i64: 8, 128>}, {pipeline_mode = #tpu.pipeline_mode<synchronous>, transform_indices = @transform_1, window_bounds = array<i64: 128, 8>}, {pipeline_mode = #tpu.pipeline_mode<synchronous>, transform_indices = @transform_2, window_bounds = array<i64: 8, 128>}, {transform_indices = @transform_3, window_bounds = array<i64: 8, 128>}, {transform_indices = @transform_4, window_bounds = array<i64: 8, 128>}, {transform_indices = @transform_5, window_bounds = array<i64: 8, 128>}, {transform_indices = @transform_6, window_bounds = array<i64: 8, 128>}]} {
    %c0 = arith.constant 0 : index
    %c0_0 = arith.constant 0 : index
    %0 = vector.load %arg1[%c0, %c0_0] : memref<8x128xf32, #tpu.memory_space<vmem>>, vector<8x128xf32>
    %c0_1 = arith.constant 0 : index
    %c0_2 = arith.constant 0 : index
    %1 = vector.load %arg2[%c0_1, %c0_2] : memref<128x8xf32, #tpu.memory_space<vmem>>, vector<128x8xf32>
    %cst = arith.constant dense<0.000000e+00> : vector<8x8xf32>
    %2 = tpu.matmul %0, %1, %cst {dimension_numbers = #tpu.dot_dimension_numbers<[1], [0], [0], [1], [0, 0, 1, 1], [], []>} : vector<8x128xf32>, vector<128x8xf32>, vector<8x8xf32> -> vector<8x8xf32>
    %cst_3 = arith.constant 0.000000e+00 : f32
    %3 = vector.broadcast %cst_3 : f32 to vector<8x8xf32>
    %4 = arith.maximumf %2, %3 : vector<8x8xf32>
    %c0_4 = arith.constant 0 : index
    %c0_5 = arith.constant 0 : index
    %5 = vector.load %arg3[%c0_4, %c0_5] : memref<8x128xf32, #tpu.memory_space<vmem>>, vector<8x128xf32>
    %cst_6 = arith.constant dense<0.000000e+00> : vector<8x128xf32>
    %6 = tpu.matmul %4, %5, %cst_6 {dimension_numbers = #tpu.dot_dimension_numbers<[1], [0], [0], [1], [0, 0, 1, 1], [], []>} : vector<8x8xf32>, vector<8x128xf32>, vector<8x128xf32> -> vector<8x128xf32>
    %7 = arith.negf %6 : vector<8x128xf32>
    %8 = math.exp %7 : vector<8x128xf32>
    %cst_7 = arith.constant 1.000000e+00 : f32
    %9 = vector.broadcast %cst_7 : f32 to vector<8x128xf32>
    %10 = arith.addf %9, %8 : vector<8x128xf32>
    %11 = arith.divf %9, %10 : vector<8x128xf32>
    %12 = arith.negf %0 : vector<8x128xf32>
    %13 = math.exp %12 : vector<8x128xf32>
    %cst_8 = arith.constant 1.000000e+00 : f32
    %14 = vector.broadcast %cst_8 : f32 to vector<8x128xf32>
    %15 = arith.addf %14, %13 : vector<8x128xf32>
    %16 = arith.divf %14, %15 : vector<8x128xf32>
    %17 = arith.mulf %0, %11 : vector<8x128xf32>
    %c0_9 = arith.constant 0 : index
    %c0_10 = arith.constant 0 : index
    %18 = vector.load %arg4[%c0_9, %c0_10] : memref<8x128xf32, #tpu.memory_space<vmem>>, vector<8x128xf32>
    tpu.vector_store %arg4[%c0_9, %c0_10], %17 {strides = array<i32>} : memref<8x128xf32, #tpu.memory_space<vmem>>, vector<8x128xf32>,
    %19 = arith.mulf %0, %16 : vector<8x128xf32>
    %c0_11 = arith.constant 0 : index
    %c0_12 = arith.constant 0 : index
    %20 = vector.load %arg5[%c0_11, %c0_12] : memref<8x128xf32, #tpu.memory_space<vmem>>, vector<8x128xf32>
    tpu.vector_store %arg5[%c0_11, %c0_12], %19 {strides = array<i32>} : memref<8x128xf32, #tpu.memory_space<vmem>>, vector<8x128xf32>,
    %c0_13 = arith.constant 0 : index
    %c0_14 = arith.constant 0 : index
    %21 = vector.load %arg6[%c0_13, %c0_14] : memref<8x128xf32, #tpu.memory_space<vmem>>, vector<8x128xf32>
    tpu.vector_store %arg6[%c0_13, %c0_14], %11 {strides = array<i32>} : memref<8x128xf32, #tpu.memory_space<vmem>>, vector<8x128xf32>,
    %c0_15 = arith.constant 0 : index
    %c0_16 = arith.constant 0 : index
    %22 = vector.load %arg7[%c0_15, %c0_16] : memref<8x128xf32, #tpu.memory_space<vmem>>, vector<8x128xf32>
    tpu.vector_store %arg7[%c0_15, %c0_16], %16 {strides = array<i32>} : memref<8x128xf32, #tpu.memory_space<vmem>>, vector<8x128xf32>,
    return
  }
  func.func @transform_0(%arg0: i32) -> (i32, i32) {
    %c0_i32 = arith.constant 0 : i32
    %c0_i32_0 = arith.constant 0 : i32
    return %arg0, %c0_i32 : i32, i32
  }
  func.func @transform_1(%arg0: i32) -> (i32, i32) {
    %c0_i32 = arith.constant 0 : i32
    %c0_i32_0 = arith.constant 0 : i32
    %c0_i32_1 = arith.constant 0 : i32
    return %c0_i32, %c0_i32_0 : i32, i32
  }
  func.func @transform_2(%arg0: i32) -> (i32, i32) {
    %c0_i32 = arith.constant 0 : i32
    %c0_i32_0 = arith.constant 0 : i32
    %c0_i32_1 = arith.constant 0 : i32
    return %c0_i32, %c0_i32_0 : i32, i32
  }
  func.func @transform_3(%arg0: i32) -> (i32, i32) {
    %c0_i32 = arith.constant 0 : i32
    %c0_i32_0 = arith.constant 0 : i32
    return %arg0, %c0_i32 : i32, i32
  }
  func.func @transform_4(%arg0: i32) -> (i32, i32) {
    %c0_i32 = arith.constant 0 : i32
    %c0_i32_0 = arith.constant 0 : i32
    return %arg0, %c0_i32 : i32, i32
  }
  func.func @transform_5(%arg0: i32) -> (i32, i32) {
    %c0_i32 = arith.constant 0 : i32
    %c0_i32_0 = arith.constant 0 : i32
    return %arg0, %c0_i32 : i32, i32
  }
  func.func @transform_6(%arg0: i32) -> (i32, i32) {
    %c0_i32 = arith.constant 0 : i32
    %c0_i32_0 = arith.constant 0 : i32
    return %arg0, %c0_i32 : i32, i32
  }
}

</mosaic_0001>

<llo_original>
// kernel: tpu_custom_call.1
$region0: #{tpu_custom_call.1}
  #allocation0 [shape = 'u32[]', space=smem, size = 0x4, offset = 0x4, fixed_abs, tag = 'smem constant byte address 0x4 - core index']
  #allocation1 [shape = 'u32[144,128]{1,0:T(1,128)}', space=vmem, size = 0x12000, scoped, tag = 'internal scratch']
  %s0 = inlined_call_operand.vmem [shape: f32[8,128], index: 0, kind: input, shape index: {}]
  %s1 = inlined_call_operand.vmem [shape: f32[128,8], index: 1, kind: input, shape index: {}]
  %s2 = inlined_call_operand.vmem [shape: f32[8,128], index: 2, kind: input, shape index: {}]
  %s3 = inlined_call_operand.hbm [shape: f32[8,128], index: 3, kind: output, shape index: {0}]
  %s4 = inlined_call_operand.hbm [shape: f32[8,128], index: 4, kind: output, shape index: {1}]
  %s5 = inlined_call_operand.hbm [shape: f32[8,128], index: 5, kind: output, shape index: {2}]
  %s6 = inlined_call_operand.hbm [shape: f32[8,128], index: 6, kind: output, shape index: {3}]
  %7 = xla_tuple %s3, %s4, %s5, %s6
  %s8 = sld [smem:[#allocation0]]
  $region46: #{tpu_custom_call.1} parent=0
    _
  %s10 = ssub.s32 1, %s8
  %s11 = scalar_select 0, %s10, %s8
  $region1: #{tpu_custom_call.1} parent=0
    #allocation2 [shape = 'u8[4096]{0}', space=vmem, size = 0x1000, scoped, tag = 'output window, operand 0, single buffered']
    #allocation3 [shape = 's32[1]{0}', space=sflag, size = 0x4, scoped, tag = 'scoped memory for tpu_custom_call.1']
    #allocation4 [shape = 'u8[4096]{0}', space=vmem, size = 0x1000, scoped, tag = 'output window, operand 1, single buffered']
    #allocation5 [shape = 's32[1]{0}', space=sflag, size = 0x4, scoped, tag = 'scoped memory for tpu_custom_call.1']
    #allocation6 [shape = 'u8[4096]{0}', space=vmem, size = 0x1000, scoped, tag = 'output window, operand 2, single buffered']
    #allocation7 [shape = 'u8[4096]{0}', space=vmem, size = 0x1000, scoped, tag = 'output window, operand 3, single buffered']
    #allocation8 [shape = 's32[1]{0}', space=sflag, size = 0x4, scoped, tag = 'scoped memory for tpu_custom_call.1']
    %12 = vsyncpa [#allocation3], 0
    %13 = vsyncpa [#allocation5], 0
    %14 = vsyncpa [#allocation8], 0
    // Predicated region
    $region2: #{tpu_custom_call.1} parent=1 // pred_check
      _
    $region3: #{tpu_custom_call.1} parent=1 // pred_check_branch
      %16 = sbr.rel (0) target = $region5
    $region4: #{tpu_custom_call.1} parent=1 // pred_region
      _
    $region5: #{tpu_custom_call.1} parent=1 // pred_fallthru
      _
    // Predicated region
    $region6: #{tpu_custom_call.1} parent=1 // pred_check
      _
    $region7: #{tpu_custom_call.1} parent=1 // pred_check_branch
      %18 = sbr.rel (0) target = $region9
    $region8: #{tpu_custom_call.1} parent=1 // pred_region
      _
    $region9: #{tpu_custom_call.1} parent=1 // pred_fallthru
      _
    // Predicated region
    $region10: #{tpu_custom_call.1} parent=1 // pred_check
      _
    $region11: #{tpu_custom_call.1} parent=1 // pred_check_branch
      %20 = sbr.rel (0) target = $region13
    $region12: #{tpu_custom_call.1} parent=1 // pred_region
      _
    $region13: #{tpu_custom_call.1} parent=1 // pred_fallthru
      _
    %v21 = vld [vmem:[%s0] sm:$0xff]
    %v22 = vld [vmem:[%s1] sm:$0xff]
    %v23 = vld [vmem:[%s1 + $0x8] sm:$0xff]
    %v24 = vld [vmem:[%s1 + $0x10] sm:$0xff]
    %v25 = vld [vmem:[%s1 + $0x18] sm:$0xff]
    %v26 = vld [vmem:[%s1 + $0x20] sm:$0xff]
    %v27 = vld [vmem:[%s1 + $0x28] sm:$0xff]
    %v28 = vld [vmem:[%s1 + $0x30] sm:$0xff]
    %v29 = vld [vmem:[%s1 + $0x38] sm:$0xff]
    %v30 = vld [vmem:[%s1 + $0x40] sm:$0xff]
    %v31 = vld [vmem:[%s1 + $0x48] sm:$0xff]
    %v32 = vld [vmem:[%s1 + $0x50] sm:$0xff]
    %v33 = vld [vmem:[%s1 + $0x58] sm:$0xff]
    %v34 = vld [vmem:[%s1 + $0x60] sm:$0xff]
    %v35 = vld [vmem:[%s1 + $0x68] sm:$0xff]
    %v36 = vld [vmem:[%s1 + $0x70] sm:$0xff]
    %v37 = vld [vmem:[%s1 + $0x78] sm:$0xff]
    %38 = vmatprep.subr.mxu0 0.0
    %39 = vmatpush1.msra.mxu0 %v22
    %40 = vmatprep.subr.mxu0 0.0
    %41 = vmatpush1.msra.mxu0 %v23
    %42 = vmatprep.subr.mxu0 0.0
    %43 = vmatpush1.msra.mxu0 %v24
    %44 = vmatprep.subr.mxu0 0.0
    %45 = vmatpush1.msra.mxu0 %v25
    %46 = vmatprep.subr.mxu0 0.0
    %47 = vmatpush1.msra.mxu0 %v26
    %48 = vmatprep.subr.mxu0 0.0
    %49 = vmatpush1.msra.mxu0 %v27
    %50 = vmatprep.subr.mxu0 0.0
    %51 = vmatpush1.msra.mxu0 %v28
    %52 = vmatprep.subr.mxu0 0.0
    %53 = vmatpush1.msra.mxu0 %v29
    %54 = vmatprep.subr.mxu0 0.0
    %55 = vmatpush1.msra.mxu0 %v30
    %56 = vmatprep.subr.mxu0 0.0
    %57 = vmatpush1.msra.mxu0 %v31
    %58 = vmatprep.subr.mxu0 0.0
    %59 = vmatpush1.msra.mxu0 %v32
    %60 = vmatprep.subr.mxu0 0.0
    %61 = vmatpush1.msra.mxu0 %v33
    %62 = vmatprep.subr.mxu0 0.0
    %63 = vmatpush1.msra.mxu0 %v34
    %64 = vmatprep.subr.mxu0 0.0
    %65 = vmatpush1.msra.mxu0 %v35
    %66 = vmatprep.subr.mxu0 0.0
    %67 = vmatpush1.msra.mxu0 %v36
    %68 = vmatprep.subr.mxu0 0.0
    %69 = vmatpush1.msra.mxu0 %v37
    %70 = vmatprep.subr.mxu0 0.0
    %71 = vmatpush1.msra.mxu0 0.0
    %72 = vmatprep.subr.mxu0 0.0
    %73 = vmatpush1.msra.mxu0 0.0
    %74 = vmatprep.subr.mxu0 0.0
    %75 = vmatpush1.msra.mxu0 0.0
    %76 = vmatprep.subr.mxu0 0.0
    %77 = vmatpush1.msra.mxu0 0.0
    %78 = vmatprep.subr.mxu0 0.0
    %79 = vmatpush1.msra.mxu0 0.0
    %80 = vmatprep.subr.mxu0 0.0
    %81 = vmatpush1.msra.mxu0 0.0
    %82 = vmatprep.subr.mxu0 0.0
    %83 = vmatpush1.msra.mxu0 0.0
    %84 = vmatprep.subr.mxu0 0.0
    %85 = vmatpush1.msra.mxu0 0.0
    %86 = vmatprep.subr.mxu0 0.0
    %87 = vmatpush1.msra.mxu0 0.0
    %88 = vmatprep.subr.mxu0 0.0
    %89 = vmatpush1.msra.mxu0 0.0
    %90 = vmatprep.subr.mxu0 0.0
    %91 = vmatpush1.msra.mxu0 0.0
    %92 = vmatprep.subr.mxu0 0.0
    %93 = vmatpush1.msra.mxu0 0.0
    %94 = vmatprep.subr.mxu0 0.0
    %95 = vmatpush1.msra.mxu0 0.0
    %96 = vmatprep.subr.mxu0 0.0
    %97 = vmatpush1.msra.mxu0 0.0
    %98 = vmatprep.subr.mxu0 0.0
    %99 = vmatpush1.msra.mxu0 0.0
    %100 = vmatprep.subr.mxu0 0.0
    %101 = vmatpush1.msra.mxu0 0.0
    %102 = vmatprep.mubr.f32.mxu0 0.0
    %103 = vmatmul.mubr.f32.gmra.mrb[0].mxu0 %v21
    %v104 = vpop.f32.mrb[0].mxu0
    %v105 = vadd.f32 0.0, %v104
    %v106 = vpop.f32.mrb[0].mxu0
    %107 = vdwg.mxu0
    %v108 = vmax.f32 %v105, 0.0
    %v109 = vld [vmem:[%s2] sm:$0xff]
    %vm110 = vcmask 64512
    %v112 = vsel %vm110, %v108, 0
    %114 = vmatprep.subr.mxu0 0.0
    %115 = vmatpush1.msra.mxu0 %v109
    %116 = vmatprep.subr.mxu0 0.0
    %117 = vmatpush1.msra.mxu0 0.0
    %118 = vmatprep.subr.mxu0 0.0
    %119 = vmatpush1.msra.mxu0 0.0
    %120 = vmatprep.subr.mxu0 0.0
    %121 = vmatpush1.msra.mxu0 0.0
    %122 = vmatprep.subr.mxu0 0.0
    %123 = vmatpush1.msra.mxu0 0.0
    %124 = vmatprep.subr.mxu0 0.0
    %125 = vmatpush1.msra.mxu0 0.0
    %126 = vmatprep.subr.mxu0 0.0
    %127 = vmatpush1.msra.mxu0 0.0
    %128 = vmatprep.subr.mxu0 0.0
    %129 = vmatpush1.msra.mxu0 0.0
    %130 = vmatprep.subr.mxu0 0.0
    %131 = vmatpush1.msra.mxu0 0.0
    %132 = vmatprep.subr.mxu0 0.0
    %133 = vmatpush1.msra.mxu0 0.0
    %134 = vmatprep.subr.mxu0 0.0
    %135 = vmatpush1.msra.mxu0 0.0
    %136 = vmatprep.subr.mxu0 0.0
    %137 = vmatpush1.msra.mxu0 0.0
    %138 = vmatprep.subr.mxu0 0.0
    %139 = vmatpush1.msra.mxu0 0.0
    %140 = vmatprep.subr.mxu0 0.0
    %141 = vmatpush1.msra.mxu0 0.0
    %142 = vmatprep.subr.mxu0 0.0
    %143 = vmatpush1.msra.mxu0 0.0
    %144 = vmatprep.subr.mxu0 0.0
    %145 = vmatpush1.msra.mxu0 0.0
    %146 = vmatprep.subr.mxu0 0.0
    %147 = vmatpush1.msra.mxu0 0.0
    %148 = vmatprep.subr.mxu0 0.0
    %149 = vmatpush1.msra.mxu0 0.0
    %150 = vmatprep.subr.mxu0 0.0
    %151 = vmatpush1.msra.mxu0 0.0
    %152 = vmatprep.subr.mxu0 0.0
    %153 = vmatpush1.msra.mxu0 0.0
    %154 = vmatprep.subr.mxu0 0.0
    %155 = vmatpush1.msra.mxu0 0.0
    %156 = vmatprep.subr.mxu0 0.0
    %157 = vmatpush1.msra.mxu0 0.0
    %158 = vmatprep.subr.mxu0 0.0
    %159 = vmatpush1.msra.mxu0 0.0
    %160 = vmatprep.subr.mxu0 0.0
    %161 = vmatpush1.msra.mxu0 0.0
    %162 = vmatprep.subr.mxu0 0.0
    %163 = vmatpush1.msra.mxu0 0.0
    %164 = vmatprep.subr.mxu0 0.0
    %165 = vmatpush1.msra.mxu0 0.0
    %166 = vmatprep.subr.mxu0 0.0
    %167 = vmatpush1.msra.mxu0 0.0
    %168 = vmatprep.subr.mxu0 0.0
    %169 = vmatpush1.msra.mxu0 0.0
    %170 = vmatprep.subr.mxu0 0.0
    %171 = vmatpush1.msra.mxu0 0.0
    %172 = vmatprep.subr.mxu0 0.0
    %173 = vmatpush1.msra.mxu0 0.0
    %174 = vmatprep.subr.mxu0 0.0
    %175 = vmatpush1.msra.mxu0 0.0
    %176 = vmatprep.subr.mxu0 0.0
    %177 = vmatpush1.msra.mxu0 0.0
    %178 = vmatprep.mubr.f32.mxu0 0.0
    %179 = vmatmul.mubr.f32.gmra.mrb[0].mxu0 %v112
    %v180 = vpop.f32.mrb[0].mxu0
    %v181 = vadd.f32 0.0, %v180
    %v182 = vpop.f32.mrb[0].mxu0
    %183 = vdwg.mxu0
    %v184 = vxor.u32 %v181, 2147483648
    %v185 = vmul.f32 %v184, 1.442695
    %v186 = vpow.pop %v185
    %v187 = vadd.f32 %v186, 1.0
    %v188 = vrcp.pop %v187
    %v189 = vmul.f32 1.0, %v188
    %v190 = vxor.u32 %v21, 2147483648
    %v191 = vmul.f32 %v190, 1.442695
    %v192 = vpow.pop %v191
    %v193 = vadd.f32 %v192, 1.0
    %v194 = vrcp.pop %v193
    %v195 = vmul.f32 1.0, %v194
    %v196 = vmul.f32 %v21, %v189
    %197 = vst [vmem:[#allocation2] sm:$0xff] %v196
    %v198 = vmul.f32 %v21, %v195
    %199 = vst [vmem:[#allocation4] sm:$0xff] %v198
    %200 = vst [vmem:[#allocation6] sm:$0xff] %v189
    %201 = vst [vmem:[#allocation7] sm:$0xff] %v195
    // Predicated region
    $region14: #{tpu_custom_call.1} parent=1 // pred_check
      _
    $region15: #{tpu_custom_call.1} parent=1 // pred_check_branch
      %203 = sbr.rel (0) target = $region17
    $region16: #{tpu_custom_call.1} parent=1 // pred_region
      %s205 = ssub.s32 128, 128
      %206 = vsyncadd [#allocation3], %s205
      %s208 = sshll.u32 [#allocation2], 4
      %s209 = int_to_ptr.vmem [resolvable:$true] %s208
      %211 = dma.vmem_to_hbm [thread:$0]  %s209, 128, %s3, [#allocation3]
    $region17: #{tpu_custom_call.1} parent=1 // pred_fallthru
      _
    // Predicated region
    $region18: #{tpu_custom_call.1} parent=1 // pred_check
      _
    $region19: #{tpu_custom_call.1} parent=1 // pred_check_branch
      %213 = sbr.rel (0) target = $region21
    $region20: #{tpu_custom_call.1} parent=1 // pred_region
      %s215 = ssub.s32 128, 128
      %216 = vsyncadd [#allocation5], %s215
      %s218 = sshll.u32 [#allocation4], 4
      %s219 = int_to_ptr.vmem [resolvable:$true] %s218
      %221 = dma.vmem_to_hbm [thread:$0]  %s219, 128, %s4, [#allocation5]
    $region21: #{tpu_custom_call.1} parent=1 // pred_fallthru
      _
    // Predicated region
    $region22: #{tpu_custom_call.1} parent=1 // pred_check
      _
    $region23: #{tpu_custom_call.1} parent=1 // pred_check_branch
      %223 = sbr.rel (0) target = $region25
    $region24: #{tpu_custom_call.1} parent=1 // pred_region
      %s225 = ssub.s32 128, 128
      %226 = vsyncadd [#allocation5], %s225
      %s228 = sshll.u32 [#allocation6], 4
      %s229 = int_to_ptr.vmem [resolvable:$true] %s228
      %231 = dma.vmem_to_hbm [thread:$0]  %s229, 128, %s5, [#allocation5]
    $region25: #{tpu_custom_call.1} parent=1 // pred_fallthru
      _
    // Predicated region
    $region26: #{tpu_custom_call.1} parent=1 // pred_check
      _
    $region27: #{tpu_custom_call.1} parent=1 // pred_check_branch
      %233 = sbr.rel (0) target = $region29
    $region28: #{tpu_custom_call.1} parent=1 // pred_region
      %s235 = ssub.s32 128, 128
      %236 = vsyncadd [#allocation8], %s235
      %s238 = sshll.u32 [#allocation7], 4
      %s239 = int_to_ptr.vmem [resolvable:$true] %s238
      %241 = dma.vmem_to_hbm [thread:$0]  %s239, 128, %s6, [#allocation8]
    $region29: #{tpu_custom_call.1} parent=1 // pred_fallthru
      _
    // Predicated region
    $region30: #{tpu_custom_call.1} parent=1 // pred_check
      _
    $region31: #{tpu_custom_call.1} parent=1 // pred_check_branch
      %243 = sbr.rel (0) target = $region33
    $region32: #{tpu_custom_call.1} parent=1 // pred_region
      %244 = dma.done [#allocation3], 128
    $region33: #{tpu_custom_call.1} parent=1 // pred_fallthru
      _
    // Predicated region
    $region34: #{tpu_custom_call.1} parent=1 // pred_check
      _
    $region35: #{tpu_custom_call.1} parent=1 // pred_check_branch
      %246 = sbr.rel (0) target = $region37
    $region36: #{tpu_custom_call.1} parent=1 // pred_region
      %247 = dma.done [#allocation5], 128
    $region37: #{tpu_custom_call.1} parent=1 // pred_fallthru
      _
    // Predicated region
    $region38: #{tpu_custom_call.1} parent=1 // pred_check
      _
    $region39: #{tpu_custom_call.1} parent=1 // pred_check_branch
      %249 = sbr.rel (0) target = $region41
    $region40: #{tpu_custom_call.1} parent=1 // pred_region
      %250 = dma.done [#allocation5], 128
    $region41: #{tpu_custom_call.1} parent=1 // pred_fallthru
      _
    // Predicated region
    $region42: #{tpu_custom_call.1} parent=1 // pred_check
      _
    $region43: #{tpu_custom_call.1} parent=1 // pred_check_branch
      %252 = sbr.rel (0) target = $region45
    $region44: #{tpu_custom_call.1} parent=1 // pred_region
      %253 = dma.done [#allocation8], 128
    $region45: #{tpu_custom_call.1} parent=1 // pred_fallthru
      _
    %254 = vsyncpa [#allocation3], 1
    %255 = vsyncpa [#allocation5], 1
    %256 = vsyncpa [#allocation8], 1

</llo_original>
